<compile_context>
chip_gen: v6e
topology: v6e:2x2x1
jax: 0.10.0
libtpu: 0.0.40
codegen_flags: <defaults>
</compile_context>

<pallas_src>
import functools

import numpy as np
import jax
import jax.numpy as jnp
from jax.experimental import pallas as pl
from jax.experimental.pallas import tpu as pltpu

N_HARMONIC = 4
HARMONIC_EMBED_DIM = N_HARMONIC * 2 * 3 + 3      # 27 (sin, cos, append_input)
_HARM_PAD = 32                                    # lane-padded harmonic operand width
_VMEM_LIMIT_BYTES = 48 * 1024 * 1024              # safe on v5e/v6e (128 MiB) and v7x (64 MiB)


def _pick_tile(dim, preferred, quantum):
    """Largest multiple of `quantum` <= preferred that divides `dim`, else `dim` itself."""
    if dim <= preferred:
        return dim
    t = (preferred // quantum) * quantum
    while t >= quantum:
        if dim % t == 0:
            return t
        t -= quantum
    return dim


def _build_harm_perm():
    # Kernel harmonic layout (freq-major):  [sin f0..f3 | cos f0..f3 | rel_n], 3 coords each.
    # Torch/pytorch3d layout (coord-major): [sin: x*f0..f3, y*f0..f3, z*f0..f3 | cos ... | rel_n]
    # perm[kernel_col] = torch_col, used to permute W1's harmonic rows host-side.
    perm = []
    for g in range(2):                    # sin block, cos block
        for j in range(N_HARMONIC):       # frequency 1,2,4,8
            for i in range(3):            # coordinate x,y,z
                perm.append(g * 3 * N_HARMONIC + i * N_HARMONIC + j)
    perm.extend(2 * 3 * N_HARMONIC + i for i in range(3))
    return np.asarray(perm, dtype=np.int32)


_HARM_PERM = _build_harm_perm()


# ----------------------------------------------------------------------------
# Kernel 1: pairwise squared distances  d[b, n, p] = || c[b,n] - q[b,p] ||^2
# Lane-dense: every intermediate is an (tn, tp) tile with P on the lane axis.
# ----------------------------------------------------------------------------
def _sqdist_kernel(c_ref, pt_ref, o_ref):
    c = c_ref[0]                  # (tn, 3)
    pt = pt_ref[0]                # (3, tp)   points passed pre-transposed
    d0 = c[:, 0:1] - pt[0:1, :]   # (tn, tp)
    d1 = c[:, 1:2] - pt[1:2, :]
    d2 = c[:, 2:3] - pt[2:3, :]
    o_ref[0] = d0 * d0 + d1 * d1 + d2 * d2


def pairwise_sqdist(coords, pts, *, tn=None, tp=None):
    B, N, _ = coords.shape
    _, P, _ = pts.shape
    pts_t = jnp.swapaxes(pts, 1, 2)                       # (B, 3, P)
    tn = tn or _pick_tile(N, 512, 8)
    tp = tp or _pick_tile(P, 1024, 128)                   # output tile <= 2 MiB f32
    grid = (B, N // tn, P // tp)
    return pl.pallas_call(
        _sqdist_kernel,
        out_shape=jax.ShapeDtypeStruct((B, N, P), jnp.float32),
        grid=grid,
        in_specs=[
            pl.BlockSpec((1, tn, 3), lambda b, i, j: (b, i, 0)),
            pl.BlockSpec((1, 3, tp), lambda b, i, j: (b, 0, j)),
        ],
        out_specs=pl.BlockSpec((1, tn, tp), lambda b, i, j: (b, i, j)),
        compiler_params=pltpu.CompilerParams(
            dimension_semantics=("parallel", "parallel", "parallel"),
            vmem_limit_bytes=_VMEM_LIMIT_BYTES),
    )(coords, pts_t)


# ----------------------------------------------------------------------------
# Kernel 2: fused gather + harmonic embedding + MLP + IDW reduction.
# One grid step processes tile_n query points of one batch: M = tile_n * K MLP rows.
# ----------------------------------------------------------------------------
def _query_kernel(idx_ref, w_ref, c_ref, pts_ref, embw_ref, w1h_ref, b1_ref,
                  w2_ref, b2_ref, out_ref, harm_ref, *, compute_dtype):
    tile_n, K = idx_ref.shape[1], idx_ref.shape[2]
    P = pts_ref.shape[1]
    M = tile_n * K
    cdt = compute_dtype

    # ---- fused KNN gathers via a one-hot MXU matmul (no HBM round trip) ----
    idx3 = idx_ref[0][:, :, None]                                        # (tile_n, K, 1)
    lane_ids = jax.lax.broadcasted_iota(jnp.int32, (tile_n, K, P), 2)
    onehot = (lane_ids == idx3).astype(jnp.float32).reshape(M, P)        # (M, P)

    # nearest-neighbour positions (exact row select, keep geometry in f32)
    nn = jnp.dot(onehot, pts_ref[0], preferred_element_type=jnp.float32)      # (M, 3)
    # pf @ W1_pf, with the embedding table pre-multiplied into W1's pf rows
    pfw = jnp.dot(onehot.astype(cdt), embw_ref[...],
                  preferred_element_type=jnp.float32)                          # (M, H)

    # ---- relative position + F.normalize(., eps=1e-12) via rsqrt (EUP) ----
    coords = c_ref[0]                                                    # (tile_n, 3)
    rel = (coords[:, None, :] - nn.reshape(tile_n, K, 3)).reshape(M, 3)  # (M, 3)
    ssq = jnp.sum(rel * rel, axis=-1, keepdims=True)                     # (M, 1)
    rel_n = rel * jax.lax.rsqrt(jnp.maximum(ssq, 1e-24))

    # ---- harmonic embedding: double-angle recurrence, 6 transcendentals / point ----
    s = [jnp.sin(rel_n)]
    c = [jnp.cos(rel_n)]
    for _ in range(N_HARMONIC - 1):
        s_prev, c_prev = s[-1], c[-1]
        s.append(2.0 * s_prev * c_prev)            # sin(2x) = 2 sin x cos x
        c.append(1.0 - 2.0 * s_prev * s_prev)      # cos(2x) = 1 - 2 sin^2 x

    # assemble the lane-padded MXU operand in VMEM scratch (no concatenates)
    for j in range(N_HARMONIC):
        harm_ref[:, 3 * j:3 * j + 3] = s[j]
        harm_ref[:, 3 * N_HARMONIC + 3 * j:3 * N_HARMONIC + 3 * j + 3] = c[j]
    harm_ref[:, 24:27] = rel_n
    harm_ref[:, 27:_HARM_PAD] = jnp.zeros((M, _HARM_PAD - HARMONIC_EMBED_DIM), jnp.float32)

    # ---- 2-layer MLP: x @ W1 split into pf-part (folded) + harmonic-part ----
    h = pfw + jnp.dot(harm_ref[...].astype(cdt), w1h_ref[...],
                      preferred_element_type=jnp.float32)
    h = jnp.maximum(h + b1_ref[...], 0.0)                                # (M, H)
    y = jnp.dot(h.astype(cdt), w2_ref[...],
                preferred_element_type=jnp.float32) + b2_ref[...]        # (M, Dout)

    # ---- inverse-distance weighted reduction over K (weights pre-normalized over N) ----
    w = w_ref[0]                                                         # (tile_n, K)
    dout = y.shape[-1]
    out_ref[0] = jnp.sum(y.reshape(tile_n, K, dout) * w[:, :, None], axis=1)


def query_points(idx, weights, coords, pts, embW, w1h, b1, w2, b2, *,
                 compute_dtype=jnp.float32, tile_n=None):
    B, N, K = idx.shape
    P, H = embW.shape
    Dout = w2.shape[1]
    tile_n = tile_n or _pick_tile(N, max(8, 2048 // K), 8)
    M = tile_n * K
    n_tiles = N // tile_n
    cdt = compute_dtype

    b1_2d = b1.reshape(1, H).astype(jnp.float32)
    b2_2d = b2.reshape(1, Dout).astype(jnp.float32)

    kernel = functools.partial(_query_kernel, compute_dtype=cdt)
    return pl.pallas_call(
        kernel,
        out_shape=jax.ShapeDtypeStruct((B, N, Dout), jnp.float32),
        grid=(B, n_tiles),
        in_specs=[
            pl.BlockSpec((1, tile_n, K), lambda b, t: (b, t, 0)),   # idx (int32)
            pl.BlockSpec((1, tile_n, K), lambda b, t: (b, t, 0)),   # normalized IDW weights
            pl.BlockSpec((1, tile_n, 3), lambda b, t: (b, t, 0)),   # query coordinates
            pl.BlockSpec((1, P, 3),      lambda b, t: (b, 0, 0)),   # this batch's point cloud
            pl.BlockSpec((P, H),         lambda b, t: (0, 0)),      # embed @ W1_pf (shared)
            pl.BlockSpec((_HARM_PAD, H), lambda b, t: (0, 0)),      # permuted/padded W1_harm
            pl.BlockSpec((1, H),         lambda b, t: (0, 0)),      # b1
            pl.BlockSpec((H, Dout),      lambda b, t: (0, 0)),      # W2
            pl.BlockSpec((1, Dout),      lambda b, t: (0, 0)),      # b2
        ],
        out_specs=pl.BlockSpec((1, tile_n, Dout), lambda b, t: (b, t, 0)),
        scratch_shapes=[pltpu.VMEM((M, _HARM_PAD), jnp.float32)],
        compiler_params=pltpu.CompilerParams(
            dimension_semantics=("parallel", "parallel"),
            vmem_limit_bytes=_VMEM_LIMIT_BYTES),
    )(idx, weights, coords, pts, embW.astype(cdt), w1h.astype(cdt), b1_2d,
      w2.astype(cdt), b2_2d)


# ----------------------------------------------------------------------------
# Full DynamicPointsQuerier forward (glue around the two kernels)
# ----------------------------------------------------------------------------
def dynamic_points_querier_forward(coordinates, points_position, K, params, *,
                                   compute_dtype=jnp.float32):
    coords = coordinates.astype(jnp.float32)
    pts = points_position.astype(jnp.float32)

    # knn_points: Pallas pairwise distances + XLA top_k (ascending squared distances)
    sqd = pairwise_sqdist(coords, pts)                       # (B, N, P)
    neg_top, idx = jax.lax.top_k(-sqd, K)
    dist = -neg_top                                          # (B, N, K)

    # inverse-distance weights, normalized over the N axis (torch dim=1).
    # NOTE: dist == 0 gives inf/NaN exactly like the torch module (no extra eps added).
    w = 1.0 / dist
    w = w / jnp.sum(w, axis=1, keepdims=True)                # tiny (B, N, K), stays in XLA

    # Fold the embedding table through the pf rows of W1 (exact algebraic refactor):
    # embed[idx] @ W1_pf == onehot(idx) @ (embed @ W1_pf).
    Dp = params["embed"].shape[1]
    H = params["w1"].shape[1]
    embW = jnp.matmul(params["embed"], params["w1"][:Dp],
                      precision=jax.lax.Precision.HIGHEST)   # (P, H)

    # Permute W1's harmonic rows to the kernel's freq-major layout and lane-pad 27 -> 32.
    w1_harm = params["w1"][Dp:]                              # (27, H), torch column order
    w1_harm = jnp.concatenate(
        [w1_harm[_HARM_PERM],
         jnp.zeros((_HARM_PAD - HARMONIC_EMBED_DIM, H), jnp.float32)], axis=0)

    out = query_points(idx, w, coords, pts, embW, w1_harm,
                       params["b1"], params["w2"], params["b2"],
                       compute_dtype=compute_dtype)
    return out, dist


# ----------------------------------------------------------------------------
# Pure-JAX reference (mirrors the torch math) used only to sanity-check the kernels.
# ----------------------------------------------------------------------------
def _reference(coordinates, points_position, K, params):
    coords = coordinates.astype(jnp.float32)
    pts = points_position.astype(jnp.float32)
    diff = coords[:, :, None, :] - pts[:, None, :, :]
    sqd = jnp.sum(diff * diff, axis=-1)
    neg_top, idx = jax.lax.top_k(-sqd, K)
    dist = -neg_top
    pf = params["embed"][idx]
    nn = jax.vmap(lambda p, i: p[i])(pts, idx)
    rel = coords[:, :, None, :] - nn
    norm = jnp.sqrt(jnp.sum(rel * rel, axis=-1, keepdims=True))
    rel_n = rel / jnp.maximum(norm, 1e-12)
    freqs = 2.0 ** jnp.arange(N_HARMONIC, dtype=jnp.float32)
    emb = (rel_n[..., None] * freqs).reshape(*rel_n.shape[:-1], 3 * N_HARMONIC)
    harm = jnp.concatenate([jnp.sin(emb), jnp.cos(emb), rel_n], axis=-1)
    x = jnp.concatenate([pf, harm], axis=-1)
    h = jnp.maximum(x @ params["w1"] + params["b1"], 0.0)
    y = h @ params["w2"] + params["b2"]
    w = 1.0 / dist
    w = w / jnp.sum(w, axis=1, keepdims=True)
    out = jnp.sum(y * w[..., None], axis=2)
    return out, dist


if __name__ == "__main__":
    # Small, module-consistent shapes.
    B, N, P, K = 2, 16, 64, 8
    in_dim = points_dim = 32                # embedding feeds Linear(in_dim + 27, ...)
    outputs_dim = 32
    Din = in_dim + HARMONIC_EMBED_DIM       # 59
    H = outputs_dim * 2                     # 64

    key = jax.random.PRNGKey(0)
    k_c, k_p, k_e, k_w1, k_b1, k_w2, k_b2 = jax.random.split(key, 7)

    coordinates = jax.random.normal(k_c, (B, N, 3), jnp.float32)
    points_position = jax.random.normal(k_p, (B, P, 3), jnp.float32)

    params = {
        "embed": jax.random.normal(k_e, (P, points_dim), jnp.float32),
        "w1": jax.random.normal(k_w1, (Din, H), jnp.float32) * 0.1,
        "b1": jax.random.normal(k_b1, (H,), jnp.float32) * 0.1,
        "w2": jax.random.normal(k_w2, (H, outputs_dim), jnp.float32) * 0.1,
        "b2": jax.random.normal(k_b2, (outputs_dim,), jnp.float32) * 0.1,
    }

    # f32 path
    out, dist = dynamic_points_querier_forward(coordinates, points_position, K, params)
    out = jax.block_until_ready(out)
    dist = jax.block_until_ready(dist)

    with jax.default_matmul_precision("highest"):
        ref_out, ref_dist = _reference(coordinates, points_position, K, params)
    ref_out = jax.block_until_ready(ref_out)

    assert out.shape == (B, N, outputs_dim) and dist.shape == (B, N, K)
    assert jnp.allclose(dist, ref_dist, rtol=1e-5, atol=1e-5)
    assert jnp.allclose(out, ref_out, rtol=1e-3, atol=1e-3)

    # bf16 MXU path (v6e/v7x): bf16 weights/activations, f32 accumulation.
    out_bf16, _ = dynamic_points_querier_forward(
        coordinates, points_position, K, params, compute_dtype=jnp.bfloat16)
    out_bf16 = jax.block_until_ready(out_bf16)
    assert jnp.allclose(out_bf16, ref_out, rtol=5e-2, atol=5e-2)

    print("KERNEL_OK")
</pallas_src>

<mosaic_0001>
module attributes {stable_mosaic.version = 11 : i64} {
  func.func @_sqdist_kernel(%arg0: i32, %arg1: i32, %arg2: i32, %arg3: memref<1x16x3xf32, #tpu.memory_space<vmem>>, %arg4: memref<1x3x64xf32, #tpu.memory_space<vmem>>, %arg5: memref<1x16x64xf32, #tpu.memory_space<vmem>>) attributes {dimension_semantics = [#tpu.dimension_semantics<parallel>, #tpu.dimension_semantics<parallel>, #tpu.dimension_semantics<parallel>], iteration_bounds = array<i64: 2, 1, 1>, scalar_prefetch = 0 : i64, scratch_operands = 0 : i64, tpu.core_type = #tpu.core_type<tc>, window_params = [{transform_indices = @transform_0, window_bounds = array<i64: 1, 16, 3>}, {transform_indices = @transform_1, window_bounds = array<i64: 1, 3, 64>}, {transform_indices = @transform_2, window_bounds = array<i64: 1, 16, 64>}]} {
    %c0 = arith.constant 0 : index
    %c0_0 = arith.constant 0 : index
    %c0_1 = arith.constant 0 : index
    %0 = vector.load %arg3[%c0, %c0_0, %c0_1] : memref<1x16x3xf32, #tpu.memory_space<vmem>>, vector<1x16x3xf32>
    %1 = vector.shape_cast %0 : vector<1x16x3xf32> to vector<16x3xf32>
    %c0_2 = arith.constant 0 : index
    %c0_3 = arith.constant 0 : index
    %c0_4 = arith.constant 0 : index
    %2 = vector.load %arg4[%c0_2, %c0_3, %c0_4] : memref<1x3x64xf32, #tpu.memory_space<vmem>>, vector<1x3x64xf32>
    %3 = vector.shape_cast %2 : vector<1x3x64xf32> to vector<3x64xf32>
    %4 = vector.extract_strided_slice %1 {offsets = [0, 0], sizes = [16, 1], strides = [1, 1]} : vector<16x3xf32> to vector<16x1xf32>
    %5 = vector.extract_strided_slice %3 {offsets = [0, 0], sizes = [1, 64], strides = [1, 1]} : vector<3x64xf32> to vector<1x64xf32>
    %6 = vector.broadcast %4 : vector<16x1xf32> to vector<16x64xf32>
    %7 = vector.broadcast %5 : vector<1x64xf32> to vector<16x64xf32>
    %8 = arith.subf %6, %7 : vector<16x64xf32>
    %9 = vector.extract_strided_slice %1 {offsets = [0, 1], sizes = [16, 1], strides = [1, 1]} : vector<16x3xf32> to vector<16x1xf32>
    %10 = vector.extract_strided_slice %3 {offsets = [1, 0], sizes = [1, 64], strides = [1, 1]} : vector<3x64xf32> to vector<1x64xf32>
    %11 = vector.broadcast %9 : vector<16x1xf32> to vector<16x64xf32>
    %12 = vector.broadcast %10 : vector<1x64xf32> to vector<16x64xf32>
    %13 = arith.subf %11, %12 : vector<16x64xf32>
    %14 = vector.extract_strided_slice %1 {offsets = [0, 2], sizes = [16, 1], strides = [1, 1]} : vector<16x3xf32> to vector<16x1xf32>
    %15 = vector.extract_strided_slice %3 {offsets = [2, 0], sizes = [1, 64], strides = [1, 1]} : vector<3x64xf32> to vector<1x64xf32>
    %16 = vector.broadcast %14 : vector<16x1xf32> to vector<16x64xf32>
    %17 = vector.broadcast %15 : vector<1x64xf32> to vector<16x64xf32>
    %18 = arith.subf %16, %17 : vector<16x64xf32>
    %19 = arith.mulf %8, %8 : vector<16x64xf32>
    %20 = arith.mulf %13, %13 : vector<16x64xf32>
    %21 = arith.addf %19, %20 : vector<16x64xf32>
    %22 = arith.mulf %18, %18 : vector<16x64xf32>
    %23 = arith.addf %21, %22 : vector<16x64xf32>
    %c0_5 = arith.constant 0 : index
    %c0_6 = arith.constant 0 : index
    %c0_7 = arith.constant 0 : index
    %24 = vector.load %arg5[%c0_5, %c0_6, %c0_7] : memref<1x16x64xf32, #tpu.memory_space<vmem>>, vector<1x16x64xf32>
    %25 = vector.shape_cast %24 : vector<1x16x64xf32> to vector<16x64xf32>
    %26 = vector.shape_cast %23 : vector<16x64xf32> to vector<1x16x64xf32>
    tpu.vector_store %arg5[%c0_5, %c0_6, %c0_7], %26 {strides = array<i32>} : memref<1x16x64xf32, #tpu.memory_space<vmem>>, vector<1x16x64xf32>,
    return
  }
  func.func @transform_0(%arg0: i32, %arg1: i32, %arg2: i32) -> (i32, i32, i32) {
    %c0_i32 = arith.constant 0 : i32
    %c0_i32_0 = arith.constant 0 : i32
    return %arg0, %arg1, %c0_i32 : i32, i32, i32
  }
  func.func @transform_1(%arg0: i32, %arg1: i32, %arg2: i32) -> (i32, i32, i32) {
    %c0_i32 = arith.constant 0 : i32
    %c0_i32_0 = arith.constant 0 : i32
    return %arg0, %c0_i32, %arg2 : i32, i32, i32
  }
  func.func @transform_2(%arg0: i32, %arg1: i32, %arg2: i32) -> (i32, i32, i32) {
    %c0_i32 = arith.constant 0 : i32
    return %arg0, %arg1, %arg2 : i32, i32, i32
  }
}

</mosaic_0001>

<llo_original>
// kernel: tpu_custom_call.1
$region0: #{tpu_custom_call.1}
  #allocation0 [shape = 'u32[]', space=smem, size = 0x4, offset = 0x4, fixed_abs, tag = 'smem constant byte address 0x4 - core index']
  #allocation1 [shape = 'u32[144,128]{1,0:T(1,128)}', space=vmem, size = 0x12000, scoped, tag = 'internal scratch']
  %s0 = inlined_call_operand.vmem [shape: f32[2,16,3], index: 0, kind: input, shape index: {}]
  %s1 = inlined_call_operand.vmem [shape: f32[2,3,64], index: 1, kind: input, shape index: {}]
  %s2 = inlined_call_operand.hbm [shape: f32[2,16,64], index: 2, kind: output, shape index: {}]
  %s3 = sld [smem:[#allocation0]]
  $region41: #{tpu_custom_call.1} parent=0
    _
  %s5 = ssub.s32 1, %s3
  %s6 = scalar_select 0, %s5, %s3
  $region1: #{tpu_custom_call.1} parent=0
    #allocation2 [shape = 'u8[16384]{0}', space=vmem, size = 0x4000, scoped, tag = 'output window, operand 0']
    #allocation3 [shape = 's32[2]{0}', space=sflag, size = 0x8, scoped, tag = 'scoped memory for tpu_custom_call.1']
    %7 = vsyncpa [#allocation3], 0
    %s8 = scalar_lea.sflag [#allocation3], 1
    %9 = vsyncpa %s8, 0
    loop: start=0, step=1, limit=4
    $region2: #{tpu_custom_call.1} parent=1 // loop_pre_header
      _
    $region3: #{tpu_custom_call.1} parent=1 // loop_header
      %s11 = sphi 0, %s15
      %p12 = scmp.ge.s32.totalorder %s11, 4
      %s18 = sphi 0, %s37
      %s19 = sphi 0, %s33
      %s20 = sphi 0, %s29
      %s21 = sphi 0, %s18
      %s22 = sphi 0, %s19
      %s23 = sphi 0, %s20
      %s24 = sphi 0, %s21
      %s25 = sphi 0, %s22
      %s26 = sphi 0, %s23
      %s42 = sphi 0, %s44
      %s45 = sphi 0, %s42
      %s46 = sphi 0, %s45
      %s62 = sphi 0, %s46
      %s70 = sphi 0, %s72
      %s73 = sphi 0, %s70
      %s74 = sphi 0, %s73
      %s90 = sphi 0, %s74
      %s100 = sphi 0, %s102
      %s103 = sphi 0, %s100
      %s104 = sphi 0, %s103
      %s120 = sphi 0, %s104
    $region4: #{tpu_custom_call.1} parent=1 // loop_header_branch
      %14 = sbr.rel (%p12) target = $region8
    $region5: #{tpu_custom_call.1} parent=1 // loop_body
      %s16 = ssub.s32 %s11, 1
      %s17 = ssub.s32 %s11, 2
      %s27 = sadd.s32 1, %s20
      %p28 = scmp.ge.s32.totalorder %s27, 1
      %s29 = scalar_select %p28, 0, %s27
      %s30 = sadd.s32 1, %s19
      %s31 = scalar_select %p28, %s30, %s19
      %p32 = scmp.ge.s32.totalorder %s31, 1
      %s33 = scalar_select %p32, 0, %s31
      %s34 = sadd.s32 1, %s18
      %s35 = scalar_select %p32, %s34, %s18
      %p36 = scmp.ge.s32.totalorder %s35, 2
      %s37 = scalar_select %p36, 0, %s35
      %s38 = ssub.s32 %s18, %s37
      %s39 = ssub.s32 %s19, %s33
      %s40 = sor.u32 %s38, %s39
      %p41 = scmp.eq.s32.totalorder %s40, 0
      %s43 = sadd.s32 %s42, 1
      %s44 = scalar_select %p41, %s42, %s43
      %p47 = pneg %p41
      %p48 = scmp.eq.s32.totalorder %s11, 1
      %p49 = por %p47, %p48
      %p50 = scmp.ne.s32.totalorder %s42, %s45
      %p51 = scmp.eq.s32.totalorder %s11, 0
      %p52 = por %p50, %p51
      %p53 = scmp.ne.s32.totalorder %s42, %s45
      %p54 = scmp.eq.s32.totalorder %s16, 1
      %p55 = por %p53, %p54
      %p56 = scmp.ne.s32.totalorder %s45, %s46
      %p57 = scmp.eq.s32.totalorder %s16, 0
      %p58 = por %p56, %p57
      %p59 = scmp.ne.s32.totalorder %s45, %s46
      %p60 = scmp.eq.s32.totalorder %s17, 1
      %p61 = por %p59, %p60
      %p63 = scmp.ne.s32.totalorder %s46, %s62
      %p64 = scmp.eq.s32.totalorder %s17, 0
      %p65 = por %p63, %p64
      %s66 = ssub.s32 %s18, %s37
      %s67 = ssub.s32 %s20, %s29
      %s68 = sor.u32 %s66, %s67
      %p69 = scmp.eq.s32.totalorder %s68, 0
      %s71 = sadd.s32 %s70, 1
      %s72 = scalar_select %p69, %s70, %s71
      %p75 = pneg %p69
      %p76 = scmp.eq.s32.totalorder %s11, 1
      %p77 = por %p75, %p76
      %p78 = scmp.ne.s32.totalorder %s70, %s73
      %p79 = scmp.eq.s32.totalorder %s11, 0
      %p80 = por %p78, %p79
      %p81 = scmp.ne.s32.totalorder %s70, %s73
      %p82 = scmp.eq.s32.totalorder %s16, 1
      %p83 = por %p81, %p82
      %p84 = scmp.ne.s32.totalorder %s73, %s74
      %p85 = scmp.eq.s32.totalorder %s16, 0
      %p86 = por %p84, %p85
      %p87 = scmp.ne.s32.totalorder %s73, %s74
      %p88 = scmp.eq.s32.totalorder %s17, 1
      %p89 = por %p87, %p88
      %p91 = scmp.ne.s32.totalorder %s74, %s90
      %p92 = scmp.eq.s32.totalorder %s17, 0
      %p93 = por %p91, %p92
      %s94 = ssub.s32 %s18, %s37
      %s95 = ssub.s32 %s19, %s33
      %s96 = sor.u32 %s94, %s95
      %s97 = ssub.s32 %s20, %s29
      %s98 = sor.u32 %s96, %s97
      %p99 = scmp.eq.s32.totalorder %s98, 0
      %s101 = sadd.s32 %s100, 1
      %s102 = scalar_select %p99, %s100, %s101
      %p105 = pneg %p99
      %p106 = scmp.eq.s32.totalorder %s11, 1
      %p107 = por %p105, %p106
      %p108 = scmp.ne.s32.totalorder %s100, %s103
      %p109 = scmp.eq.s32.totalorder %s11, 0
      %p110 = por %p108, %p109
      %p111 = scmp.ne.s32.totalorder %s100, %s103
      %p112 = scmp.eq.s32.totalorder %s16, 1
      %p113 = por %p111, %p112
      %p114 = scmp.ne.s32.totalorder %s103, %s104
      %p115 = scmp.eq.s32.totalorder %s16, 0
      %p116 = por %p114, %p115
      %p117 = scmp.ne.s32.totalorder %s103, %s104
      %p118 = scmp.eq.s32.totalorder %s17, 1
      %p119 = por %p117, %p118
      %p121 = scmp.ne.s32.totalorder %s104, %s120
      %p122 = scmp.eq.s32.totalorder %s17, 0
      %p123 = por %p121, %p122
      %p124 = scmp.le.s32.totalorder 1, %s11
      %p125 = scmp.lt.s32.totalorder %s11, 3
      %p126 = pnand %p124, %p125
      %p127 = pneg %p126
      // Predicated region
      $region9: #{tpu_custom_call.1} parent=5 // pred_check
        _
      $region10: #{tpu_custom_call.1} parent=5 // pred_check_branch
        %129 = sbr.rel (%p126) target = $region12
      $region11: #{tpu_custom_call.1} parent=5 // pred_region
        %s130 = ssub.s32 %s11, 1
      $region12: #{tpu_custom_call.1} parent=5 // pred_fallthru
        _
      %p131 = scmp.lt.s32.totalorder %s11, 2
      // Predicated region
      $region13: #{tpu_custom_call.1} parent=5 // pred_check
        %p132 = pneg %p131
      $region14: #{tpu_custom_call.1} parent=5 // pred_check_branch
        %134 = sbr.rel (%p132) target = $region16
      $region15: #{tpu_custom_call.1} parent=5 // pred_region
        // Predicated region
        $region17: #{tpu_custom_call.1} parent=15 // pred_check
          %p135 = pneg %p52
        $region18: #{tpu_custom_call.1} parent=15 // pred_check_branch
          %137 = sbr.rel (%p135) target = $region20
        $region19: #{tpu_custom_call.1} parent=15 // pred_region
          %s138 = smul.u32 2, %s19
          %p139 = scmp.lt.s32.totalorder %s18, 1
          %s140 = scalar_select %p139, %s18, 1
          %p141 = scmp.lt.s32.totalorder %s138, 1
          %s142 = scalar_select %p141, %s138, 1
          %s143 = smul.addr %s140, 2
          %s144 = sadd.s32 %s142, %s143
          %s145 = smul.addr %s144, 8
          %s146 = scalar_lea.vmem %s0, %s145
          %s147 = smul.u32 2, %s19
        $region20: #{tpu_custom_call.1} parent=15 // pred_fallthru
          _
        // Predicated region
        $region21: #{tpu_custom_call.1} parent=15 // pred_check
          %p148 = pneg %p80
        $region22: #{tpu_custom_call.1} parent=15 // pred_check_branch
          %150 = sbr.rel (%p148) target = $region24
        $region23: #{tpu_custom_call.1} parent=15 // pred_region
          %p151 = scmp.lt.s32.totalorder %s18, 1
          %s152 = scalar_select %p151, %s18, 1
          %p153 = scmp.lt.s32.totalorder %s20, 0
          %s154 = scalar_select %p153, %s20, 0
          %s155 = sadd.s32 %s154, %s152
          %s156 = smul.addr %s155, 4
          %s157 = scalar_lea.vmem %s1, %s156
        $region24: #{tpu_custom_call.1} parent=15 // pred_fallthru
          _
      $region16: #{tpu_custom_call.1} parent=5 // pred_fallthru
        _
      %p158 = scmp.le.s32.totalorder 1, %s11
      %p159 = scmp.lt.s32.totalorder %s11, 3
      %p160 = pnand %p158, %p159
      %p161 = pneg %p160
      // Predicated region
      $region25: #{tpu_custom_call.1} parent=5 // pred_check
        _
      $region26: #{tpu_custom_call.1} parent=5 // pred_check_branch
        %163 = sbr.rel (%p160) target = $region28
      $region27: #{tpu_custom_call.1} parent=5 // pred_region
        %s164 = ssub.s32 %s11, 1
        %s165 = smul.u32 2, %s22
        %p166 = scmp.lt.s32.totalorder %s21, 1
        %s167 = scalar_select %p166, %s21, 1
        %p168 = scmp.lt.s32.totalorder %s165, 1
        %s169 = scalar_select %p168, %s165, 1
        %s170 = smul.addr %s167, 2
        %s171 = sadd.s32 %s169, %s170
        %s172 = smul.addr %s171, 8
        %s173 = scalar_lea.vmem %s0, %s172
        %p174 = pneg %p58
        %p175 = pneg %p55
        %p176 = scmp.lt.s32.totalorder %s21, 1
        %s177 = scalar_select %p176, %s21, 1
        %p178 = scmp.lt.s32.totalorder %s23, 0
        %s179 = scalar_select %p178, %s23, 0
        %s180 = sadd.s32 %s179, %s177
        %s181 = smul.addr %s180, 4
        %s182 = scalar_lea.vmem %s1, %s181
        %p183 = pneg %p86
        %p184 = pneg %p83
        %p185 = pneg %p116
        %p186 = pneg %p113
        %s187 = sand.u32 %s103, 1
        %s188 = scalar_lea.sflag [#allocation3], %s187
        %s189 = sand.u32 %s103, 1
        %s190 = smul.addr %s189, 16
        %s191 = scalar_lea.vmem [#allocation2], %s190
        %s192 = smul.u32 2, %s22
        %p193 = scmp.lt.s32.totalorder %s21, 1
        %s194 = scalar_select %p193, %s21, 1
        %p195 = scmp.lt.s32.totalorder %s192, 1
        %s196 = scalar_select %p195, %s192, 1
        %s197 = smul.addr %s194, 2
        %s198 = sadd.s32 %s196, %s197
        %s199 = smul.addr %s198, 8
        %s200 = scalar_lea.vmem %s0, %s199
        %s201 = smul.u32 2, %s22
        %p202 = scmp.lt.s32.totalorder %s21, 1
        %s203 = scalar_select %p202, %s21, 1
        %p204 = scmp.lt.s32.totalorder %s23, 0
        %s205 = scalar_select %p204, %s23, 0
        %s206 = sadd.s32 %s205, %s203
        %s207 = smul.addr %s206, 4
        %s208 = scalar_lea.vmem %s1, %s207
        %s209 = smul.u32 2, %s22
        %v210 = vld [vmem:[%s200] sm:$0xff]
        %v211 = vld [vmem:[%s200 + $0x8] sm:$0xff]
        %v212 = vld [vmem:[%s208] sm:$0x7]
        %214 = vset.pattern.permute.xlu0 0
        %215 = vperm.xlu0 %214, %v210
        %v216 = vpop.permute.xlu0 %215
        %219 = vset.pattern.permute.xlu0 0
        %220 = vperm.xlu0 %219, %v211
        %v221 = vpop.permute.xlu0 %220
        %v223 = vlaneseq
        %v224 = vshrl.u32 %v223, 7
        %v225 = vsub.s32 0, %v224
        %v226 = vrot.slane %v212, %v225
        %v227 = vsub.f32 %v216, %v226
        %v228 = vsub.f32 %v221, %v226
        %229 = vset.pattern.permute.xlu0 1
        %230 = vperm.xlu0 %229, %v210
        %v231 = vpop.permute.xlu0 %230
        %233 = vset.pattern.permute.xlu0 1
        %234 = vperm.xlu0 %233, %v211
        %v235 = vpop.permute.xlu0 %234
        %v237 = vlaneseq
        %v238 = vshrl.u32 %v237, 7
        %v239 = vsub.s32 1, %v238
        %v240 = vrot.slane %v212, %v239
        %v241 = vsub.f32 %v231, %v240
        %v242 = vsub.f32 %v235, %v240
        %243 = vset.pattern.permute.xlu0 2
        %244 = vperm.xlu0 %243, %v210
        %v245 = vpop.permute.xlu0 %244
        %247 = vset.pattern.permute.xlu0 2
        %248 = vperm.xlu0 %247, %v211
        %v249 = vpop.permute.xlu0 %248
        %v251 = vlaneseq
        %v252 = vshrl.u32 %v251, 7
        %v253 = vsub.s32 2, %v252
        %v254 = vrot.slane %v212, %v253
        %v255 = vsub.f32 %v245, %v254
        %v256 = vsub.f32 %v249, %v254
        %v257 = vmul.f32 %v227, %v227
        %v258 = vmul.f32 %v228, %v228
        %v259 = vmul.f32 %v241, %v241
        %v260 = vmul.f32 %v242, %v242
        %v261 = vadd.f32 %v257, %v259
        %v262 = vadd.f32 %v258, %v260
        %v263 = vmul.f32 %v255, %v255
        %v264 = vmul.f32 %v256, %v256
        %v265 = vadd.f32 %v261, %v263
        %v266 = vadd.f32 %v262, %v264
        %vm267 = vcmask 523264
        %268 = vst.msk [vmem:[%s191] sm:$0xff] %vm267, %v265
        %269 = vst.msk [vmem:[%s191 + $0x8] sm:$0xff] %vm267, %v266
        %s270 = sand.u32 %s103, 1
        %s271 = scalar_lea.sflag [#allocation3], %s270
        %s272 = sand.u32 %s103, 1
        %s273 = smul.addr %s272, 16
        %s274 = scalar_lea.vmem [#allocation2], %s273
        // Predicated region
        $region29: #{tpu_custom_call.1} parent=27 // pred_check
          %p275 = pneg %p113
        $region30: #{tpu_custom_call.1} parent=27 // pred_check_branch
          %277 = sbr.rel (%p275) target = $region32
        $region31: #{tpu_custom_call.1} parent=27 // pred_region
          %s278 = smul.u32 2, %s22
          %s280 = ssub.s32 256, 256
          %281 = vsyncadd %s271, %s280
          %s282 = sadd.s32 %s23, %s278
          %s283 = smul.addr %s21, 2
          %s284 = sadd.s32 %s282, %s283
          %s285 = smul.addr %s284, 128
          %s286 = scalar_lea.hbm %s2, %s285
          %s287 = sshll.u32 %s274, 4
          %s288 = int_to_ptr.vmem [resolvable:$true] %s287
          %293 = dma.vmem_to_hbm [thread:$0]  %s288, 256, %s286, %s271, 128, 128, 8
        $region32: #{tpu_custom_call.1} parent=27 // pred_fallthru
          _
      $region28: #{tpu_custom_call.1} parent=5 // pred_fallthru
        _
      %p294 = scmp.le.s32.totalorder 2, %s11
      // Predicated region
      $region33: #{tpu_custom_call.1} parent=5 // pred_check
        %p295 = pneg %p294
      $region34: #{tpu_custom_call.1} parent=5 // pred_check_branch
        %297 = sbr.rel (%p295) target = $region36
      $region35: #{tpu_custom_call.1} parent=5 // pred_region
        %s298 = ssub.s32 %s11, 2
        // Predicated region
        $region37: #{tpu_custom_call.1} parent=35 // pred_check
          %p299 = pneg %p119
        $region38: #{tpu_custom_call.1} parent=35 // pred_check_branch
          %301 = sbr.rel (%p299) target = $region40
        $region39: #{tpu_custom_call.1} parent=35 // pred_region
          %s302 = sand.u32 %s104, 1
          %s303 = scalar_lea.sflag [#allocation3], %s302
          %s304 = sand.u32 %s104, 1
          %s305 = smul.addr %s304, 16
          %s306 = scalar_lea.vmem [#allocation2], %s305
          %307 = dma.done %s303, 256
        $region40: #{tpu_custom_call.1} parent=35 // pred_fallthru
          _
      $region36: #{tpu_custom_call.1} parent=5 // pred_fallthru
        _
    $region6: #{tpu_custom_call.1} parent=1 // loop_footer
      %s15 = sadd.s32 1, %s11
    $region7: #{tpu_custom_call.1} parent=1 // loop_footer_branch
      %10 = sbr.rel target = $region3
    $region8: #{tpu_custom_call.1} parent=1 // loop_exit
      _
    %308 = vsyncpa [#allocation3], 1
    %s309 = scalar_lea.sflag [#allocation3], 1
    %310 = vsyncpa %s309, 1

</llo_original>
